<compile_context>
chip_gen: v7x
topology: tpu7x:2x2x1
jax: 0.10.0
libtpu: 0.0.40
codegen_flags: <defaults>
</compile_context>

<pallas_src>
import functools

import jax
import jax.numpy as jnp
from jax.experimental import pallas as pl
from jax.experimental.pallas import tpu as pltpu


def _round_up(a, m):
    return ((a + m - 1) // m) * m


def _plan_tiles(P, max_lanes=2048):
    """Choose the lane tile TP (multiple of 128) and padded pixel count Ppad."""
    Ppad = _round_up(P, 128)
    m = Ppad // 128
    tmax = max(1, max_lanes // 128)
    # largest divisor of m not exceeding tmax -> biggest lane tile that tiles Ppad
    t = 1
    for cand in range(1, min(m, tmax) + 1):
        if m % cand == 0:
            t = cand
    # prefer >= 2 grid steps so "parallel" can shard the pixel axis across the
    # two TensorCores on v7x and amortize per-step overhead
    if m // t < 2 and m >= 2:
        for cand in range(min(m // 2, tmax), 0, -1):
            if m % cand == 0:
                t = cand
                break
    TP = t * 128
    return TP, Ppad, Ppad // TP


def _abc_kernel(*refs, if_bias):
    """out[b, k, p] = sum_d w[d, k, p] * xg[b, d, p]  (+ bias[k])."""
    if if_bias:
        w_ref, xg_ref, bias_ref, o_ref = refs
    else:
        w_ref, xg_ref, o_ref = refs
        bias_ref = None

    D = w_ref.shape[0]
    B = xg_ref.shape[0]

    # Accumulating D-loop on the VPU: no (B, K, D, TP) intermediate, no
    # cross-sublane (XLU) reduction. w[d] is loaded once per d and reused for
    # every batch element.
    w0 = w_ref[0]                                         # (K, TP)
    accs = [w0 * xg_ref[b, 0:1, :] for b in range(B)]     # each (K, TP)
    for d in range(1, D):
        wd = w_ref[d]                                     # (K, TP)
        for b in range(B):
            accs[b] = accs[b] + wd * xg_ref[b, d:d + 1, :]

    for b in range(B):
        acc = accs[b]
        if if_bias:
            acc = acc + bias_ref[0]                       # (K, 1) lane-broadcast
        o_ref[b] = acc.astype(o_ref.dtype)


def prepare_weights(weights):
    """torch-layout weights (P, K, D) -> kernel layout (D, K, Ppad).

    Call ONCE at module init; doing the transpose per forward would roughly
    double the HBM traffic of this (bandwidth-bound) op.
    """
    P, K, D = weights.shape
    _, Ppad, _ = _plan_tiles(P)
    w_l = jnp.transpose(weights, (2, 1, 0))               # (D, K, P)
    if Ppad != P:
        w_l = jnp.pad(w_l, ((0, 0), (0, 0), (0, Ppad - P)))
    return w_l


def prepare_gather_index(hashtable, kernel_size, in_channel):
    """Build the flat gather index in (C, ks, H, W) order (torch.take semantics).

    With this ordering, jnp.take(x.reshape(B, C*P), idx, axis=1).reshape(B, D, P)
    is already in the kernel layout -- no extra HBM transpose of xg.
    """
    HC, H, W, Pht = hashtable.shape
    P = H * W
    ks = kernel_size
    assert H * W == Pht, "hash last dim must equal H*W"
    assert in_channel % HC == 0, "in_channel must be divisible by hash channel dim"
    assert P >= ks, "kernel_size must be <= number of pixels"
    ht = jnp.transpose(hashtable[:, :, :, :ks], (0, 3, 1, 2))      # (HC, ks, H, W)
    ch = jnp.arange(in_channel)
    idx = ht[ch % HC] + (ch * P)[:, None, None, None]              # (C, ks, H, W)
    return idx.reshape(-1).astype(jnp.int32)


def abc_2d_specific(x, w_l, bias, gather_idx, *, kernel_size, batch_size, if_bias=False):
    """Forward pass of ABC_2D_Specific.

    x          : (B, C, H, W) float32 (NCHW, as in the PyTorch module)
    w_l        : (D, K, Ppad) prepared by prepare_weights
    bias       : (1, K, 1)
    gather_idx : flat int32 index from prepare_gather_index
    """
    B, C, H, W = x.shape
    P = H * W
    ks = kernel_size
    D = C * ks
    Dw, K, Ppad_w = w_l.shape
    assert Dw == D, "weights D does not match in_channel * kernel_size"
    if B > batch_size:
        raise ValueError("The batch size of input must be smaller than the defined batch_size")

    TP, Ppad, grid = _plan_tiles(P)
    assert Ppad_w == Ppad, "weights were prepared for a different pixel_number"

    # hash gather (plain-JAX glue); result is already (B, D, P)
    # TODO(synk): jnp.take clips out-of-range hash entries instead of erroring like torch.take.
    xg_l = jnp.take(x.reshape(B, C * P), gather_idx, axis=1).reshape(B, D, P)
    if Ppad != P:
        xg_l = jnp.pad(xg_l, ((0, 0), (0, 0), (0, Ppad - P)))

    in_specs = [
        pl.BlockSpec((D, K, TP), lambda i: (0, 0, i)),   # weights (D, K, Ppad)
        pl.BlockSpec((B, D, TP), lambda i: (0, 0, i)),   # gathered input
    ]
    args = [w_l, xg_l]
    if if_bias:
        in_specs.append(pl.BlockSpec((1, K, 1), lambda i: (0, 0, 0)))  # VMEM-resident
        args.append(bias)

    out = pl.pallas_call(
        functools.partial(_abc_kernel, if_bias=if_bias),
        out_shape=jax.ShapeDtypeStruct((B, K, Ppad), x.dtype),
        grid_spec=pltpu.PrefetchScalarGridSpec(
            num_scalar_prefetch=0,
            grid=(grid,),
            in_specs=in_specs,
            out_specs=pl.BlockSpec((B, K, TP), lambda i: (0, 0, i)),
        ),
        compiler_params=pltpu.CompilerParams(
            dimension_semantics=("parallel",)),
    )(*args)

    return out[:, :, :P].reshape(B, K, H, W)


def abc_2d_specific_ref(x, weights, bias, hashtable, *, kernel_size, if_bias=False):
    """Pure-JAX mirror of the PyTorch forward (for correctness checking)."""
    B, C, H, W = x.shape
    P = H * W
    ks = kernel_size
    K = weights.shape[1]
    HC = hashtable.shape[0]
    ht = hashtable[:, :, :, :ks]
    hash_c = ht + (jnp.arange(HC) * P)[:, None, None, None]
    batch_hash = jnp.concatenate([hash_c + r * HC * P for r in range(C // HC)], axis=0)
    full = jnp.stack([batch_hash + b * C * P for b in range(B)], axis=0)   # (B,C,H,W,ks)
    xr = x.reshape(-1)[full.reshape(-1)].reshape(B, C, H, W, ks)
    xr = xr.transpose(2, 3, 1, 4, 0).reshape(P, C * ks, B)
    out = jnp.einsum('pkd,pdb->pkb', weights, xr)
    if if_bias:
        out = out + bias
    return out.transpose(2, 1, 0).reshape(B, K, H, W)


if __name__ == "__main__":
    key = jax.random.PRNGKey(0)

    # small shapes consistent with the module
    B, C, H, W = 2, 4, 16, 16        # input x: NCHW
    P = H * W                         # pixel_number
    ks = 3                            # kernel_size
    K = 8                             # kernel_number_per_pixel
    HC = 2                            # hashtable channel dim (C % HC == 0)
    batch_size = 4
    if_bias = True
    D = C * ks

    k1, k2, k3 = jax.random.split(key, 3)
    bound = (1.0 / (C * ks)) ** 0.5
    weights = jax.random.uniform(k1, (P, K, D), jnp.float32, minval=-bound, maxval=bound)
    bias = jax.random.uniform(k2, (1, K, 1), jnp.float32, minval=-bound, maxval=bound)
    x = jax.random.normal(k3, (B, C, H, W), dtype=jnp.float32)

    # deterministic hashtable: (HC, H, W, P) with values in [0, P)
    c_idx = jnp.arange(HC, dtype=jnp.int32)[:, None, None, None]
    hh = jnp.arange(H, dtype=jnp.int32)[None, :, None, None]
    hw = jnp.arange(W, dtype=jnp.int32)[None, None, :, None]
    j = jnp.arange(P, dtype=jnp.int32)[None, None, None, :]
    hashtable = (hh * W + hw + j * (2 * c_idx + 1) + 3 * c_idx) % P

    # one-time (init) preparation: kernel-layout weights + fused gather index
    w_l = prepare_weights(weights)
    gather_idx = prepare_gather_index(hashtable, ks, C)

    out = abc_2d_specific(x, w_l, bias, gather_idx,
                          kernel_size=ks, batch_size=batch_size, if_bias=if_bias)
    out = jax.block_until_ready(out)

    ref = abc_2d_specific_ref(x, weights, bias, hashtable,
                              kernel_size=ks, if_bias=if_bias)
    assert out.shape == (B, K, H, W)
    assert jnp.allclose(out, ref, atol=1e-5, rtol=1e-5), "mismatch vs reference"
    print("KERNEL_OK")
</pallas_src>

<mosaic_0001>
module attributes {stable_mosaic.version = 11 : i64} {
  func.func @_abc_kernel(%arg0: i32, %arg1: memref<12x8x128xf32, #tpu.memory_space<vmem>>, %arg2: memref<2x12x128xf32, #tpu.memory_space<vmem>>, %arg3: memref<1x8x1xf32, #tpu.memory_space<vmem>>, %arg4: memref<2x8x128xf32, #tpu.memory_space<vmem>>) attributes {dimension_semantics = [#tpu.dimension_semantics<parallel>], iteration_bounds = array<i64: 2>, scalar_prefetch = 0 : i64, scratch_operands = 0 : i64, tpu.core_type = #tpu.core_type<tc>, window_params = [{transform_indices = @transform_0, window_bounds = array<i64: 12, 8, 128>}, {transform_indices = @transform_1, window_bounds = array<i64: 2, 12, 128>}, {pipeline_mode = #tpu.pipeline_mode<synchronous>, transform_indices = @transform_2, window_bounds = array<i64: 1, 8, 1>}, {transform_indices = @transform_3, window_bounds = array<i64: 2, 8, 128>}]} {
    %c0 = arith.constant 0 : index
    %c0_0 = arith.constant 0 : index
    %c0_1 = arith.constant 0 : index
    %0 = vector.load %arg1[%c0, %c0_0, %c0_1] : memref<12x8x128xf32, #tpu.memory_space<vmem>>, vector<1x8x128xf32>
    %1 = vector.shape_cast %0 : vector<1x8x128xf32> to vector<8x128xf32>
    %c0_2 = arith.constant 0 : index
    %c0_3 = arith.constant 0 : index
    %c0_4 = arith.constant 0 : index
    %2 = vector.load %arg2[%c0_2, %c0_3, %c0_4] : memref<2x12x128xf32, #tpu.memory_space<vmem>>, vector<1x1x128xf32>
    %3 = vector.shape_cast %2 : vector<1x1x128xf32> to vector<1x128xf32>
    %4 = vector.broadcast %3 : vector<1x128xf32> to vector<8x128xf32>
    %5 = arith.mulf %1, %4 : vector<8x128xf32>
    %c1 = arith.constant 1 : index
    %c0_5 = arith.constant 0 : index
    %c0_6 = arith.constant 0 : index
    %6 = vector.load %arg2[%c1, %c0_5, %c0_6] : memref<2x12x128xf32, #tpu.memory_space<vmem>>, vector<1x1x128xf32>
    %7 = vector.shape_cast %6 : vector<1x1x128xf32> to vector<1x128xf32>
    %8 = vector.broadcast %7 : vector<1x128xf32> to vector<8x128xf32>
    %9 = arith.mulf %1, %8 : vector<8x128xf32>
    %c1_7 = arith.constant 1 : index
    %c0_8 = arith.constant 0 : index
    %c0_9 = arith.constant 0 : index
    %10 = vector.load %arg1[%c1_7, %c0_8, %c0_9] : memref<12x8x128xf32, #tpu.memory_space<vmem>>, vector<1x8x128xf32>
    %11 = vector.shape_cast %10 : vector<1x8x128xf32> to vector<8x128xf32>
    %c0_10 = arith.constant 0 : index
    %c1_11 = arith.constant 1 : index
    %c0_12 = arith.constant 0 : index
    %12 = vector.load %arg2[%c0_10, %c1_11, %c0_12] : memref<2x12x128xf32, #tpu.memory_space<vmem>>, vector<1x1x128xf32>
    %13 = vector.shape_cast %12 : vector<1x1x128xf32> to vector<1x128xf32>
    %14 = vector.broadcast %13 : vector<1x128xf32> to vector<8x128xf32>
    %15 = arith.mulf %11, %14 : vector<8x128xf32>
    %16 = arith.addf %5, %15 : vector<8x128xf32>
    %c1_13 = arith.constant 1 : index
    %c1_14 = arith.constant 1 : index
    %c0_15 = arith.constant 0 : index
    %17 = vector.load %arg2[%c1_13, %c1_14, %c0_15] : memref<2x12x128xf32, #tpu.memory_space<vmem>>, vector<1x1x128xf32>
    %18 = vector.shape_cast %17 : vector<1x1x128xf32> to vector<1x128xf32>
    %19 = vector.broadcast %18 : vector<1x128xf32> to vector<8x128xf32>
    %20 = arith.mulf %11, %19 : vector<8x128xf32>
    %21 = arith.addf %9, %20 : vector<8x128xf32>
    %c2 = arith.constant 2 : index
    %c0_16 = arith.constant 0 : index
    %c0_17 = arith.constant 0 : index
    %22 = vector.load %arg1[%c2, %c0_16, %c0_17] : memref<12x8x128xf32, #tpu.memory_space<vmem>>, vector<1x8x128xf32>
    %23 = vector.shape_cast %22 : vector<1x8x128xf32> to vector<8x128xf32>
    %c0_18 = arith.constant 0 : index
    %c2_19 = arith.constant 2 : index
    %c0_20 = arith.constant 0 : index
    %24 = vector.load %arg2[%c0_18, %c2_19, %c0_20] : memref<2x12x128xf32, #tpu.memory_space<vmem>>, vector<1x1x128xf32>
    %25 = vector.shape_cast %24 : vector<1x1x128xf32> to vector<1x128xf32>
    %26 = vector.broadcast %25 : vector<1x128xf32> to vector<8x128xf32>
    %27 = arith.mulf %23, %26 : vector<8x128xf32>
    %28 = arith.addf %16, %27 : vector<8x128xf32>
    %c1_21 = arith.constant 1 : index
    %c2_22 = arith.constant 2 : index
    %c0_23 = arith.constant 0 : index
    %29 = vector.load %arg2[%c1_21, %c2_22, %c0_23] : memref<2x12x128xf32, #tpu.memory_space<vmem>>, vector<1x1x128xf32>
    %30 = vector.shape_cast %29 : vector<1x1x128xf32> to vector<1x128xf32>
    %31 = vector.broadcast %30 : vector<1x128xf32> to vector<8x128xf32>
    %32 = arith.mulf %23, %31 : vector<8x128xf32>
    %33 = arith.addf %21, %32 : vector<8x128xf32>
    %c3 = arith.constant 3 : index
    %c0_24 = arith.constant 0 : index
    %c0_25 = arith.constant 0 : index
    %34 = vector.load %arg1[%c3, %c0_24, %c0_25] : memref<12x8x128xf32, #tpu.memory_space<vmem>>, vector<1x8x128xf32>
    %35 = vector.shape_cast %34 : vector<1x8x128xf32> to vector<8x128xf32>
    %c0_26 = arith.constant 0 : index
    %c3_27 = arith.constant 3 : index
    %c0_28 = arith.constant 0 : index
    %36 = vector.load %arg2[%c0_26, %c3_27, %c0_28] : memref<2x12x128xf32, #tpu.memory_space<vmem>>, vector<1x1x128xf32>
    %37 = vector.shape_cast %36 : vector<1x1x128xf32> to vector<1x128xf32>
    %38 = vector.broadcast %37 : vector<1x128xf32> to vector<8x128xf32>
    %39 = arith.mulf %35, %38 : vector<8x128xf32>
    %40 = arith.addf %28, %39 : vector<8x128xf32>
    %c1_29 = arith.constant 1 : index
    %c3_30 = arith.constant 3 : index
    %c0_31 = arith.constant 0 : index
    %41 = vector.load %arg2[%c1_29, %c3_30, %c0_31] : memref<2x12x128xf32, #tpu.memory_space<vmem>>, vector<1x1x128xf32>
    %42 = vector.shape_cast %41 : vector<1x1x128xf32> to vector<1x128xf32>
    %43 = vector.broadcast %42 : vector<1x128xf32> to vector<8x128xf32>
    %44 = arith.mulf %35, %43 : vector<8x128xf32>
    %45 = arith.addf %33, %44 : vector<8x128xf32>
    %c4 = arith.constant 4 : index
    %c0_32 = arith.constant 0 : index
    %c0_33 = arith.constant 0 : index
    %46 = vector.load %arg1[%c4, %c0_32, %c0_33] : memref<12x8x128xf32, #tpu.memory_space<vmem>>, vector<1x8x128xf32>
    %47 = vector.shape_cast %46 : vector<1x8x128xf32> to vector<8x128xf32>
    %c0_34 = arith.constant 0 : index
    %c4_35 = arith.constant 4 : index
    %c0_36 = arith.constant 0 : index
    %48 = vector.load %arg2[%c0_34, %c4_35, %c0_36] : memref<2x12x128xf32, #tpu.memory_space<vmem>>, vector<1x1x128xf32>
    %49 = vector.shape_cast %48 : vector<1x1x128xf32> to vector<1x128xf32>
    %50 = vector.broadcast %49 : vector<1x128xf32> to vector<8x128xf32>
    %51 = arith.mulf %47, %50 : vector<8x128xf32>
    %52 = arith.addf %40, %51 : vector<8x128xf32>
    %c1_37 = arith.constant 1 : index
    %c4_38 = arith.constant 4 : index
    %c0_39 = arith.constant 0 : index
    %53 = vector.load %arg2[%c1_37, %c4_38, %c0_39] : memref<2x12x128xf32, #tpu.memory_space<vmem>>, vector<1x1x128xf32>
    %54 = vector.shape_cast %53 : vector<1x1x128xf32> to vector<1x128xf32>
    %55 = vector.broadcast %54 : vector<1x128xf32> to vector<8x128xf32>
    %56 = arith.mulf %47, %55 : vector<8x128xf32>
    %57 = arith.addf %45, %56 : vector<8x128xf32>
    %c5 = arith.constant 5 : index
    %c0_40 = arith.constant 0 : index
    %c0_41 = arith.constant 0 : index
    %58 = vector.load %arg1[%c5, %c0_40, %c0_41] : memref<12x8x128xf32, #tpu.memory_space<vmem>>, vector<1x8x128xf32>
    %59 = vector.shape_cast %58 : vector<1x8x128xf32> to vector<8x128xf32>
    %c0_42 = arith.constant 0 : index
    %c5_43 = arith.constant 5 : index
    %c0_44 = arith.constant 0 : index
    %60 = vector.load %arg2[%c0_42, %c5_43, %c0_44] : memref<2x12x128xf32, #tpu.memory_space<vmem>>, vector<1x1x128xf32>
    %61 = vector.shape_cast %60 : vector<1x1x128xf32> to vector<1x128xf32>
    %62 = vector.broadcast %61 : vector<1x128xf32> to vector<8x128xf32>
    %63 = arith.mulf %59, %62 : vector<8x128xf32>
    %64 = arith.addf %52, %63 : vector<8x128xf32>
    %c1_45 = arith.constant 1 : index
    %c5_46 = arith.constant 5 : index
    %c0_47 = arith.constant 0 : index
    %65 = vector.load %arg2[%c1_45, %c5_46, %c0_47] : memref<2x12x128xf32, #tpu.memory_space<vmem>>, vector<1x1x128xf32>
    %66 = vector.shape_cast %65 : vector<1x1x128xf32> to vector<1x128xf32>
    %67 = vector.broadcast %66 : vector<1x128xf32> to vector<8x128xf32>
    %68 = arith.mulf %59, %67 : vector<8x128xf32>
    %69 = arith.addf %57, %68 : vector<8x128xf32>
    %c6 = arith.constant 6 : index
    %c0_48 = arith.constant 0 : index
    %c0_49 = arith.constant 0 : index
    %70 = vector.load %arg1[%c6, %c0_48, %c0_49] : memref<12x8x128xf32, #tpu.memory_space<vmem>>, vector<1x8x128xf32>
    %71 = vector.shape_cast %70 : vector<1x8x128xf32> to vector<8x128xf32>
    %c0_50 = arith.constant 0 : index
    %c6_51 = arith.constant 6 : index
    %c0_52 = arith.constant 0 : index
    %72 = vector.load %arg2[%c0_50, %c6_51, %c0_52] : memref<2x12x128xf32, #tpu.memory_space<vmem>>, vector<1x1x128xf32>
    %73 = vector.shape_cast %72 : vector<1x1x128xf32> to vector<1x128xf32>
    %74 = vector.broadcast %73 : vector<1x128xf32> to vector<8x128xf32>
    %75 = arith.mulf %71, %74 : vector<8x128xf32>
    %76 = arith.addf %64, %75 : vector<8x128xf32>
    %c1_53 = arith.constant 1 : index
    %c6_54 = arith.constant 6 : index
    %c0_55 = arith.constant 0 : index
    %77 = vector.load %arg2[%c1_53, %c6_54, %c0_55] : memref<2x12x128xf32, #tpu.memory_space<vmem>>, vector<1x1x128xf32>
    %78 = vector.shape_cast %77 : vector<1x1x128xf32> to vector<1x128xf32>
    %79 = vector.broadcast %78 : vector<1x128xf32> to vector<8x128xf32>
    %80 = arith.mulf %71, %79 : vector<8x128xf32>
    %81 = arith.addf %69, %80 : vector<8x128xf32>
    %c7 = arith.constant 7 : index
    %c0_56 = arith.constant 0 : index
    %c0_57 = arith.constant 0 : index
    %82 = vector.load %arg1[%c7, %c0_56, %c0_57] : memref<12x8x128xf32, #tpu.memory_space<vmem>>, vector<1x8x128xf32>
    %83 = vector.shape_cast %82 : vector<1x8x128xf32> to vector<8x128xf32>
    %c0_58 = arith.constant 0 : index
    %c7_59 = arith.constant 7 : index
    %c0_60 = arith.constant 0 : index
    %84 = vector.load %arg2[%c0_58, %c7_59, %c0_60] : memref<2x12x128xf32, #tpu.memory_space<vmem>>, vector<1x1x128xf32>
    %85 = vector.shape_cast %84 : vector<1x1x128xf32> to vector<1x128xf32>
    %86 = vector.broadcast %85 : vector<1x128xf32> to vector<8x128xf32>
    %87 = arith.mulf %83, %86 : vector<8x128xf32>
    %88 = arith.addf %76, %87 : vector<8x128xf32>
    %c1_61 = arith.constant 1 : index
    %c7_62 = arith.constant 7 : index
    %c0_63 = arith.constant 0 : index
    %89 = vector.load %arg2[%c1_61, %c7_62, %c0_63] : memref<2x12x128xf32, #tpu.memory_space<vmem>>, vector<1x1x128xf32>
    %90 = vector.shape_cast %89 : vector<1x1x128xf32> to vector<1x128xf32>
    %91 = vector.broadcast %90 : vector<1x128xf32> to vector<8x128xf32>
    %92 = arith.mulf %83, %91 : vector<8x128xf32>
    %93 = arith.addf %81, %92 : vector<8x128xf32>
    %c8 = arith.constant 8 : index
    %c0_64 = arith.constant 0 : index
    %c0_65 = arith.constant 0 : index
    %94 = vector.load %arg1[%c8, %c0_64, %c0_65] : memref<12x8x128xf32, #tpu.memory_space<vmem>>, vector<1x8x128xf32>
    %95 = vector.shape_cast %94 : vector<1x8x128xf32> to vector<8x128xf32>
    %c0_66 = arith.constant 0 : index
    %c8_67 = arith.constant 8 : index
    %c0_68 = arith.constant 0 : index
    %96 = vector.load %arg2[%c0_66, %c8_67, %c0_68] : memref<2x12x128xf32, #tpu.memory_space<vmem>>, vector<1x1x128xf32>
    %97 = vector.shape_cast %96 : vector<1x1x128xf32> to vector<1x128xf32>
    %98 = vector.broadcast %97 : vector<1x128xf32> to vector<8x128xf32>
    %99 = arith.mulf %95, %98 : vector<8x128xf32>
    %100 = arith.addf %88, %99 : vector<8x128xf32>
    %c1_69 = arith.constant 1 : index
    %c8_70 = arith.constant 8 : index
    %c0_71 = arith.constant 0 : index
    %101 = vector.load %arg2[%c1_69, %c8_70, %c0_71] : memref<2x12x128xf32, #tpu.memory_space<vmem>>, vector<1x1x128xf32>
    %102 = vector.shape_cast %101 : vector<1x1x128xf32> to vector<1x128xf32>
    %103 = vector.broadcast %102 : vector<1x128xf32> to vector<8x128xf32>
    %104 = arith.mulf %95, %103 : vector<8x128xf32>
    %105 = arith.addf %93, %104 : vector<8x128xf32>
    %c9 = arith.constant 9 : index
    %c0_72 = arith.constant 0 : index
    %c0_73 = arith.constant 0 : index
    %106 = vector.load %arg1[%c9, %c0_72, %c0_73] : memref<12x8x128xf32, #tpu.memory_space<vmem>>, vector<1x8x128xf32>
    %107 = vector.shape_cast %106 : vector<1x8x128xf32> to vector<8x128xf32>
    %c0_74 = arith.constant 0 : index
    %c9_75 = arith.constant 9 : index
    %c0_76 = arith.constant 0 : index
    %108 = vector.load %arg2[%c0_74, %c9_75, %c0_76] : memref<2x12x128xf32, #tpu.memory_space<vmem>>, vector<1x1x128xf32>
    %109 = vector.shape_cast %108 : vector<1x1x128xf32> to vector<1x128xf32>
    %110 = vector.broadcast %109 : vector<1x128xf32> to vector<8x128xf32>
    %111 = arith.mulf %107, %110 : vector<8x128xf32>
    %112 = arith.addf %100, %111 : vector<8x128xf32>
    %c1_77 = arith.constant 1 : index
    %c9_78 = arith.constant 9 : index
    %c0_79 = arith.constant 0 : index
    %113 = vector.load %arg2[%c1_77, %c9_78, %c0_79] : memref<2x12x128xf32, #tpu.memory_space<vmem>>, vector<1x1x128xf32>
    %114 = vector.shape_cast %113 : vector<1x1x128xf32> to vector<1x128xf32>
    %115 = vector.broadcast %114 : vector<1x128xf32> to vector<8x128xf32>
    %116 = arith.mulf %107, %115 : vector<8x128xf32>
    %117 = arith.addf %105, %116 : vector<8x128xf32>
    %c10 = arith.constant 10 : index
    %c0_80 = arith.constant 0 : index
    %c0_81 = arith.constant 0 : index
    %118 = vector.load %arg1[%c10, %c0_80, %c0_81] : memref<12x8x128xf32, #tpu.memory_space<vmem>>, vector<1x8x128xf32>
    %119 = vector.shape_cast %118 : vector<1x8x128xf32> to vector<8x128xf32>
    %c0_82 = arith.constant 0 : index
    %c10_83 = arith.constant 10 : index
    %c0_84 = arith.constant 0 : index
    %120 = vector.load %arg2[%c0_82, %c10_83, %c0_84] : memref<2x12x128xf32, #tpu.memory_space<vmem>>, vector<1x1x128xf32>
    %121 = vector.shape_cast %120 : vector<1x1x128xf32> to vector<1x128xf32>
    %122 = vector.broadcast %121 : vector<1x128xf32> to vector<8x128xf32>
    %123 = arith.mulf %119, %122 : vector<8x128xf32>
    %124 = arith.addf %112, %123 : vector<8x128xf32>
    %c1_85 = arith.constant 1 : index
    %c10_86 = arith.constant 10 : index
    %c0_87 = arith.constant 0 : index
    %125 = vector.load %arg2[%c1_85, %c10_86, %c0_87] : memref<2x12x128xf32, #tpu.memory_space<vmem>>, vector<1x1x128xf32>
    %126 = vector.shape_cast %125 : vector<1x1x128xf32> to vector<1x128xf32>
    %127 = vector.broadcast %126 : vector<1x128xf32> to vector<8x128xf32>
    %128 = arith.mulf %119, %127 : vector<8x128xf32>
    %129 = arith.addf %117, %128 : vector<8x128xf32>
    %c11 = arith.constant 11 : index
    %c0_88 = arith.constant 0 : index
    %c0_89 = arith.constant 0 : index
    %130 = vector.load %arg1[%c11, %c0_88, %c0_89] : memref<12x8x128xf32, #tpu.memory_space<vmem>>, vector<1x8x128xf32>
    %131 = vector.shape_cast %130 : vector<1x8x128xf32> to vector<8x128xf32>
    %c0_90 = arith.constant 0 : index
    %c11_91 = arith.constant 11 : index
    %c0_92 = arith.constant 0 : index
    %132 = vector.load %arg2[%c0_90, %c11_91, %c0_92] : memref<2x12x128xf32, #tpu.memory_space<vmem>>, vector<1x1x128xf32>
    %133 = vector.shape_cast %132 : vector<1x1x128xf32> to vector<1x128xf32>
    %134 = vector.broadcast %133 : vector<1x128xf32> to vector<8x128xf32>
    %135 = arith.mulf %131, %134 : vector<8x128xf32>
    %136 = arith.addf %124, %135 : vector<8x128xf32>
    %c1_93 = arith.constant 1 : index
    %c11_94 = arith.constant 11 : index
    %c0_95 = arith.constant 0 : index
    %137 = vector.load %arg2[%c1_93, %c11_94, %c0_95] : memref<2x12x128xf32, #tpu.memory_space<vmem>>, vector<1x1x128xf32>
    %138 = vector.shape_cast %137 : vector<1x1x128xf32> to vector<1x128xf32>
    %139 = vector.broadcast %138 : vector<1x128xf32> to vector<8x128xf32>
    %140 = arith.mulf %131, %139 : vector<8x128xf32>
    %141 = arith.addf %129, %140 : vector<8x128xf32>
    %c0_96 = arith.constant 0 : index
    %c0_97 = arith.constant 0 : index
    %c0_98 = arith.constant 0 : index
    %142 = vector.load %arg3[%c0_96, %c0_97, %c0_98] : memref<1x8x1xf32, #tpu.memory_space<vmem>>, vector<1x8x1xf32>
    %143 = vector.shape_cast %142 : vector<1x8x1xf32> to vector<8x1xf32>
    %144 = vector.broadcast %143 : vector<8x1xf32> to vector<8x128xf32>
    %145 = arith.addf %136, %144 : vector<8x128xf32>
    %c0_99 = arith.constant 0 : index
    %c0_100 = arith.constant 0 : index
    %c0_101 = arith.constant 0 : index
    %146 = vector.load %arg4[%c0_99, %c0_100, %c0_101] : memref<2x8x128xf32, #tpu.memory_space<vmem>>, vector<1x8x128xf32>
    %147 = vector.shape_cast %146 : vector<1x8x128xf32> to vector<8x128xf32>
    %148 = vector.shape_cast %145 : vector<8x128xf32> to vector<1x8x128xf32>
    tpu.vector_store %arg4[%c0_99, %c0_100, %c0_101], %148 {strides = array<i32>} : memref<2x8x128xf32, #tpu.memory_space<vmem>>, vector<1x8x128xf32>,
    %c0_102 = arith.constant 0 : index
    %c0_103 = arith.constant 0 : index
    %c0_104 = arith.constant 0 : index
    %149 = vector.load %arg3[%c0_102, %c0_103, %c0_104] : memref<1x8x1xf32, #tpu.memory_space<vmem>>, vector<1x8x1xf32>
    %150 = vector.shape_cast %149 : vector<1x8x1xf32> to vector<8x1xf32>
    %151 = vector.broadcast %150 : vector<8x1xf32> to vector<8x128xf32>
    %152 = arith.addf %141, %151 : vector<8x128xf32>
    %c1_105 = arith.constant 1 : index
    %c0_106 = arith.constant 0 : index
    %c0_107 = arith.constant 0 : index
    %153 = vector.load %arg4[%c1_105, %c0_106, %c0_107] : memref<2x8x128xf32, #tpu.memory_space<vmem>>, vector<1x8x128xf32>
    %154 = vector.shape_cast %153 : vector<1x8x128xf32> to vector<8x128xf32>
    %155 = vector.shape_cast %152 : vector<8x128xf32> to vector<1x8x128xf32>
    tpu.vector_store %arg4[%c1_105, %c0_106, %c0_107], %155 {strides = array<i32>} : memref<2x8x128xf32, #tpu.memory_space<vmem>>, vector<1x8x128xf32>,
    return
  }
  func.func @transform_0(%arg0: i32) -> (i32, i32, i32) {
    %c0_i32 = arith.constant 0 : i32
    %c0_i32_0 = arith.constant 0 : i32
    %c0_i32_1 = arith.constant 0 : i32
    return %c0_i32, %c0_i32_0, %arg0 : i32, i32, i32
  }
  func.func @transform_1(%arg0: i32) -> (i32, i32, i32) {
    %c0_i32 = arith.constant 0 : i32
    %c0_i32_0 = arith.constant 0 : i32
    %c0_i32_1 = arith.constant 0 : i32
    return %c0_i32, %c0_i32_0, %arg0 : i32, i32, i32
  }
  func.func @transform_2(%arg0: i32) -> (i32, i32, i32) {
    %c0_i32 = arith.constant 0 : i32
    %c0_i32_0 = arith.constant 0 : i32
    %c0_i32_1 = arith.constant 0 : i32
    %c0_i32_2 = arith.constant 0 : i32
    return %c0_i32, %c0_i32_0, %c0_i32_1 : i32, i32, i32
  }
  func.func @transform_3(%arg0: i32) -> (i32, i32, i32) {
    %c0_i32 = arith.constant 0 : i32
    %c0_i32_0 = arith.constant 0 : i32
    %c0_i32_1 = arith.constant 0 : i32
    return %c0_i32, %c0_i32_0, %arg0 : i32, i32, i32
  }
}

</mosaic_0001>

<llo_original>
// kernel: tpu_custom_call.1
$region0: #{tpu_custom_call.1}
  #allocation0 [shape = 'u32[]', space=smem, size = 0x4, offset = 0x4, fixed_abs, tag = 'smem constant byte address 0x4 - core index']
  #allocation1 [shape = 'u32[144,128]{1,0:T(1,128)}', space=vmem, size = 0x12000, scoped, tag = 'internal scratch']
  %s0 = inlined_call_operand.hbm [shape: f32[12,8,256], index: 0, kind: input, shape index: {}]
  %s1 = inlined_call_operand.vmem [shape: f32[2,12,256], index: 1, kind: input, shape index: {}]
  %s2 = inlined_call_operand.vmem [shape: f32[1,8,1], index: 2, kind: input, shape index: {}]
  %s3 = inlined_call_operand.hbm [shape: f32[2,8,256], index: 3, kind: output, shape index: {}]
  %s4 = sld [smem:[#allocation0]]
  $region87: #{tpu_custom_call.1} parent=0
    _
  %s6 = ssub.s32 1, %s4
  %s7 = scalar_select 0, %s6, %s4
  $region1: #{tpu_custom_call.1} parent=0
    #allocation2 [shape = 'u8[98304]{0}', space=vmem, size = 0x18000, scoped, tag = 'input window, operand 0']
    #allocation3 [shape = 's32[2]{0}', space=sflag, size = 0x8, scoped, tag = 'scoped memory for tpu_custom_call.1']
    #allocation4 [shape = 's32[2]{0}', space=sflag, size = 0x8, scoped, tag = 'scoped memory for tpu_custom_call.1']
    #allocation5 [shape = 'u8[32768]{0}', space=vmem, size = 0x8000, scoped, tag = 'input window, operand 1']
    #allocation6 [shape = 'u8[16384]{0}', space=vmem, size = 0x4000, scoped, tag = 'output window, operand 0']
    %8 = vsyncpa [#allocation3], 0
    %s9 = scalar_lea.sflag [#allocation3], 1
    %10 = vsyncpa %s9, 0
    %11 = vsyncpa [#allocation4], 0
    %s12 = scalar_lea.sflag [#allocation4], 1
    %13 = vsyncpa %s12, 0
    loop: start=0, step=1, limit=4
    $region2: #{tpu_custom_call.1} parent=1 // loop_pre_header
      _
    $region3: #{tpu_custom_call.1} parent=1 // loop_header
      %s15 = sphi 0, %s19
      %p16 = scmp.ge.s32.totalorder %s15, 4
      %s25 = sphi 0, %s27
      %s28 = sphi 0, %s25
      %s29 = sphi 0, %s28
      %s45 = sphi 0, %s29
      %s51 = sphi 0, %s53
      %s54 = sphi 0, %s51
      %s55 = sphi 0, %s54
      %s71 = sphi 0, %s55
      %s75 = sphi 0, %s75
      %s77 = sphi 0, %s75
      %s78 = sphi 0, %s77
      %s92 = sphi 0, %s78
      %s98 = sphi 0, %s100
      %s101 = sphi 0, %s98
      %s102 = sphi 0, %s101
      %s118 = sphi 0, %s102
    $region4: #{tpu_custom_call.1} parent=1 // loop_header_branch
      %18 = sbr.rel (%p16) target = $region8
    $region5: #{tpu_custom_call.1} parent=1 // loop_body
      %s20 = ssub.s32 %s15, 1
      %s21 = ssub.s32 %s15, 2
      %s22 = sadd.s32 %s15, 1
      %s23 = ssub.s32 %s15, %s22
      %p24 = scmp.eq.s32.totalorder %s23, 0
      %s26 = sadd.s32 %s25, 1
      %s27 = scalar_select %p24, %s25, %s26
      %p30 = pneg %p24
      %p31 = scmp.eq.s32.totalorder %s15, 1
      %p32 = por %p30, %p31
      %p33 = scmp.ne.s32.totalorder %s25, %s28
      %p34 = scmp.eq.s32.totalorder %s15, 0
      %p35 = por %p33, %p34
      %p36 = scmp.ne.s32.totalorder %s25, %s28
      %p37 = scmp.eq.s32.totalorder %s20, 1
      %p38 = por %p36, %p37
      %p39 = scmp.ne.s32.totalorder %s28, %s29
      %p40 = scmp.eq.s32.totalorder %s20, 0
      %p41 = por %p39, %p40
      %p42 = scmp.ne.s32.totalorder %s28, %s29
      %p43 = scmp.eq.s32.totalorder %s21, 1
      %p44 = por %p42, %p43
      %p46 = scmp.ne.s32.totalorder %s29, %s45
      %p47 = scmp.eq.s32.totalorder %s21, 0
      %p48 = por %p46, %p47
      %s49 = ssub.s32 %s15, %s22
      %p50 = scmp.eq.s32.totalorder %s49, 0
      %s52 = sadd.s32 %s51, 1
      %s53 = scalar_select %p50, %s51, %s52
      %p56 = pneg %p50
      %p57 = scmp.eq.s32.totalorder %s15, 1
      %p58 = por %p56, %p57
      %p59 = scmp.ne.s32.totalorder %s51, %s54
      %p60 = scmp.eq.s32.totalorder %s15, 0
      %p61 = por %p59, %p60
      %p62 = scmp.ne.s32.totalorder %s51, %s54
      %p63 = scmp.eq.s32.totalorder %s20, 1
      %p64 = por %p62, %p63
      %p65 = scmp.ne.s32.totalorder %s54, %s55
      %p66 = scmp.eq.s32.totalorder %s20, 0
      %p67 = por %p65, %p66
      %p68 = scmp.ne.s32.totalorder %s54, %s55
      %p69 = scmp.eq.s32.totalorder %s21, 1
      %p70 = por %p68, %p69
      %p72 = scmp.ne.s32.totalorder %s55, %s71
      %p73 = scmp.eq.s32.totalorder %s21, 0
      %p74 = por %p72, %p73
      %s76 = sadd.s32 %s75, 1
      %p79 = scmp.eq.s32.totalorder %s15, 1
      %p80 = scmp.ne.s32.totalorder %s75, %s77
      %p81 = scmp.eq.s32.totalorder %s15, 0
      %p82 = por %p80, %p81
      %p83 = scmp.ne.s32.totalorder %s75, %s77
      %p84 = scmp.eq.s32.totalorder %s20, 1
      %p85 = por %p83, %p84
      %p86 = scmp.ne.s32.totalorder %s77, %s78
      %p87 = scmp.eq.s32.totalorder %s20, 0
      %p88 = por %p86, %p87
      %p89 = scmp.ne.s32.totalorder %s77, %s78
      %p90 = scmp.eq.s32.totalorder %s21, 1
      %p91 = por %p89, %p90
      %p93 = scmp.ne.s32.totalorder %s78, %s92
      %p94 = scmp.eq.s32.totalorder %s21, 0
      %p95 = por %p93, %p94
      %s96 = ssub.s32 %s15, %s22
      %p97 = scmp.eq.s32.totalorder %s96, 0
      %s99 = sadd.s32 %s98, 1
      %s100 = scalar_select %p97, %s98, %s99
      %p103 = pneg %p97
      %p104 = scmp.eq.s32.totalorder %s15, 1
      %p105 = por %p103, %p104
      %p106 = scmp.ne.s32.totalorder %s98, %s101
      %p107 = scmp.eq.s32.totalorder %s15, 0
      %p108 = por %p106, %p107
      %p109 = scmp.ne.s32.totalorder %s98, %s101
      %p110 = scmp.eq.s32.totalorder %s20, 1
      %p111 = por %p109, %p110
      %p112 = scmp.ne.s32.totalorder %s101, %s102
      %p113 = scmp.eq.s32.totalorder %s20, 0
      %p114 = por %p112, %p113
      %p115 = scmp.ne.s32.totalorder %s101, %s102
      %p116 = scmp.eq.s32.totalorder %s21, 1
      %p117 = por %p115, %p116
      %p119 = scmp.ne.s32.totalorder %s102, %s118
      %p120 = scmp.eq.s32.totalorder %s21, 0
      %p121 = por %p119, %p120
      %p122 = scmp.le.s32.totalorder 1, %s15
      %p123 = scmp.lt.s32.totalorder %s15, 3
      %p124 = pnand %p122, %p123
      %p125 = pneg %p124
      // Predicated region
      $region9: #{tpu_custom_call.1} parent=5 // pred_check
        _
      $region10: #{tpu_custom_call.1} parent=5 // pred_check_branch
        %127 = sbr.rel (%p124) target = $region12
      $region11: #{tpu_custom_call.1} parent=5 // pred_region
        %s128 = ssub.s32 %s15, 1
        // Predicated region
        $region13: #{tpu_custom_call.1} parent=11 // pred_check
          %p129 = pneg %p88
        $region14: #{tpu_custom_call.1} parent=11 // pred_check_branch
          %131 = sbr.rel (%p129) target = $region16
        $region15: #{tpu_custom_call.1} parent=11 // pred_region
          _
        $region16: #{tpu_custom_call.1} parent=11 // pred_fallthru
          _
      $region12: #{tpu_custom_call.1} parent=5 // pred_fallthru
        _
      %p132 = scmp.lt.s32.totalorder %s15, 2
      // Predicated region
      $region17: #{tpu_custom_call.1} parent=5 // pred_check
        %p133 = pneg %p132
      $region18: #{tpu_custom_call.1} parent=5 // pred_check_branch
        %135 = sbr.rel (%p133) target = $region20
      $region19: #{tpu_custom_call.1} parent=5 // pred_region
        // Predicated region
        $region21: #{tpu_custom_call.1} parent=19 // pred_check
          %p136 = pneg %p35
        $region22: #{tpu_custom_call.1} parent=19 // pred_check_branch
          %138 = sbr.rel (%p136) target = $region24
        $region23: #{tpu_custom_call.1} parent=19 // pred_region
          %s139 = sand.u32 %s25, 1
          %s140 = scalar_lea.sflag [#allocation3], %s139
          %s141 = sand.u32 %s25, 1
          %s142 = smul.addr %s141, 96
          %s143 = scalar_lea.vmem [#allocation2], %s142
          %s145 = ssub.s32 1536, 1536
          %146 = vsyncadd %s140, %s145
          %s147 = smul.addr %s15, 128
          %s148 = scalar_lea.hbm %s0, %s147
          %s149 = sshll.u32 %s143, 4
          %s150 = int_to_ptr.vmem [resolvable:$true] %s149
          %155 = dma.hbm_to_vmem [thread:$0]  %s148, 1536, %s150, %s140, 256, 128, 8
        $region24: #{tpu_custom_call.1} parent=19 // pred_fallthru
          _
        // Predicated region
        $region25: #{tpu_custom_call.1} parent=19 // pred_check
          %p156 = pneg %p61
        $region26: #{tpu_custom_call.1} parent=19 // pred_check_branch
          %158 = sbr.rel (%p156) target = $region28
        $region27: #{tpu_custom_call.1} parent=19 // pred_region
          %s159 = sand.u32 %s51, 1
          %s160 = sand.u32 %s51, 1
          %s161 = smul.addr %s160, 32
          %s162 = scalar_lea.vmem [#allocation5], %s161
          %s163 = smul.addr %s15, 8
          %s164 = scalar_lea.vmem %s1, %s163
          // Predicated region
          $region29: #{tpu_custom_call.1} parent=27 // pred_check
            _
          $region30: #{tpu_custom_call.1} parent=27 // pred_check_branch
            %166 = sbr.rel (0) target = $region32
          $region31: #{tpu_custom_call.1} parent=27 // pred_region
            // Predicated region
            $region33: #{tpu_custom_call.1} parent=31 // pred_check
              _
            $region34: #{tpu_custom_call.1} parent=31 // pred_check_branch
              %168 = sbr.rel (0) target = $region36
            $region35: #{tpu_custom_call.1} parent=31 // pred_region
              // Predicated region
              $region48: #{tpu_custom_call.1} parent=35 // pred_check
                _
              $region49: #{tpu_custom_call.1} parent=35 // pred_check_branch
                %189 = sbr.rel (0) target = $region51
              $region50: #{tpu_custom_call.1} parent=35 // pred_region
                loop: start=0, step=1, limit=1
                $region52: #{tpu_custom_call.1} parent=50 // loop_pre_header
                  _
                $region53: #{tpu_custom_call.1} parent=50 // loop_header
                  %s191 = sphi 0, %s195
                  %p192 = scmp.ge.s32.totalorder %s191, 1
                  %s196 = sphi %s164, %s164
                  %s197 = sphi %s162, %s162
                $region54: #{tpu_custom_call.1} parent=50 // loop_header_branch
                  %194 = sbr.rel (%p192) target = $region58
                $region55: #{tpu_custom_call.1} parent=50 // loop_body
                  %v198 = vld [vmem:[%s196] sm:$0xff]
                  %199 = vst [vmem:[%s197] sm:$0xff] %v198
                  %v200 = vld [vmem:[%s196 + $0x10] sm:$0xff]
                  %201 = vst [vmem:[%s197 + $0x8] sm:$0xff] %v200
                  %v202 = vld [vmem:[%s196 + $0x20] sm:$0xff]
                  %203 = vst [vmem:[%s197 + $0x10] sm:$0xff] %v202
                  %v204 = vld [vmem:[%s196 + $0x30] sm:$0xff]
                  %205 = vst [vmem:[%s197 + $0x18] sm:$0xff] %v204
                $region56: #{tpu_custom_call.1} parent=50 // loop_footer
                  %s195 = sadd.s32 1, %s191
                $region57: #{tpu_custom_call.1} parent=50 // loop_footer_branch
                  %190 = sbr.rel target = $region53
                $region58: #{tpu_custom_call.1} parent=50 // loop_exit
                  _
              $region51: #{tpu_custom_call.1} parent=35 // pred_fallthru
                _
              // Predicated region
              $region59: #{tpu_custom_call.1} parent=35 // pred_check
                _
              $region60: #{tpu_custom_call.1} parent=35 // pred_check_branch
                %207 = sbr.rel target = $region62
              $region61: #{tpu_custom_call.1} parent=35 // pred_region
                _
              $region62: #{tpu_custom_call.1} parent=35 // pred_fallthru
                _
            $region36: #{tpu_custom_call.1} parent=31 // pred_fallthru
              _
            // Predicated region
            $region37: #{tpu_custom_call.1} parent=31 // pred_check
              _
            $region38: #{tpu_custom_call.1} parent=31 // pred_check_branch
              %170 = sbr.rel target = $region40
            $region39: #{tpu_custom_call.1} parent=31 // pred_region
              loop: start=0, step=1, limit=1
              $region41: #{tpu_custom_call.1} parent=39 // loop_pre_header
                _
              $region42: #{tpu_custom_call.1} parent=39 // loop_header
                %s173 = sphi 0, %s177
                %p174 = scmp.ge.s32.totalorder %s173, 1
                %s178 = sphi %s164, %s164
                %s179 = sphi %s162, %s162
              $region43: #{tpu_custom_call.1} parent=39 // loop_header_branch
                %176 = sbr.rel (%p174) target = $region47
              $region44: #{tpu_custom_call.1} parent=39 // loop_body
                %v180 = vld [vmem:[%s178] sm:$0xff]
                %181 = vst [vmem:[%s179] sm:$0xff] %v180
                %v182 = vld [vmem:[%s178 + $0x10] sm:$0xff]
                %183 = vst [vmem:[%s179 + $0x8] sm:$0xff] %v182
                %v184 = vld [vmem:[%s178 + $0x20] sm:$0xff]
                %185 = vst [vmem:[%s179 + $0x10] sm:$0xff] %v184
                %v186 = vld [vmem:[%s178 + $0x30] sm:$0xff]
                %187 = vst [vmem:[%s179 + $0x18] sm:$0xff] %v186
              $region45: #{tpu_custom_call.1} parent=39 // loop_footer
                %s177 = sadd.s32 1, %s173
              $region46: #{tpu_custom_call.1} parent=39 // loop_footer_branch
                %172 = sbr.rel target = $region42
              $region47: #{tpu_custom_call.1} parent=39 // loop_exit
                _
            $region40: #{tpu_custom_call.1} parent=31 // pred_fallthru
              _
          $region32: #{tpu_custom_call.1} parent=27 // pred_fallthru
            _
          %208 = vnop
        $region28: #{tpu_custom_call.1} parent=19 // pred_fallthru
          _
      $region20: #{tpu_custom_call.1} parent=5 // pred_fallthru
        _
      %p209 = scmp.le.s32.totalorder 1, %s15
      %p210 = scmp.lt.s32.totalorder %s15, 3
      %p211 = pnand %p209, %p210
      %p212 = pneg %p211
      // Predicated region
      $region63: #{tpu_custom_call.1} parent=5 // pred_check
        _
      $region64: #{tpu_custom_call.1} parent=5 // pred_check_branch
        %214 = sbr.rel (%p211) target = $region66
      $region65: #{tpu_custom_call.1} parent=5 // pred_region
        %s215 = ssub.s32 %s15, 1
        %s216 = sand.u32 %s28, 1
        %s217 = scalar_lea.sflag [#allocation3], %s216
        %s218 = sand.u32 %s28, 1
        %s219 = smul.addr %s218, 96
        %s220 = scalar_lea.vmem [#allocation2], %s219
        // Predicated region
        $region67: #{tpu_custom_call.1} parent=65 // pred_check
          %p221 = pneg %p41
        $region68: #{tpu_custom_call.1} parent=65 // pred_check_branch
          %223 = sbr.rel (%p221) target = $region70
        $region69: #{tpu_custom_call.1} parent=65 // pred_region
          %224 = dma.done %s217, 1536
        $region70: #{tpu_custom_call.1} parent=65 // pred_fallthru
          _
        %s225 = sand.u32 %s54, 1
        %s226 = sand.u32 %s54, 1
        %s227 = smul.addr %s226, 32
        %s228 = scalar_lea.vmem [#allocation5], %s227
        // Predicated region
        $region71: #{tpu_custom_call.1} parent=65 // pred_check
          %p229 = pneg %p67
        $region72: #{tpu_custom_call.1} parent=65 // pred_check_branch
          %231 = sbr.rel (%p229) target = $region74
        $region73: #{tpu_custom_call.1} parent=65 // pred_region
          _
        $region74: #{tpu_custom_call.1} parent=65 // pred_fallthru
          _
        %s232 = sand.u32 %s28, 1
        %s233 = scalar_lea.sflag [#allocation3], %s232
        %s234 = sand.u32 %s28, 1
        %s235 = smul.addr %s234, 96
        %s236 = scalar_lea.vmem [#allocation2], %s235
        %p237 = pneg %p41
        %p238 = pneg %p38
        %s239 = sand.u32 %s54, 1
        %s240 = sand.u32 %s54, 1
        %s241 = smul.addr %s240, 32
        %s242 = scalar_lea.vmem [#allocation5], %s241
        %p243 = pneg %p67
        %p244 = pneg %p64
        %p245 = pneg %p88
        %p246 = pneg %p85
        %p247 = pneg %p114
        %p248 = pneg %p111
        %s249 = sand.u32 %s101, 1
        %s250 = scalar_lea.sflag [#allocation4], %s249
        %s251 = sand.u32 %s101, 1
        %s252 = smul.addr %s251, 16
        %s253 = scalar_lea.vmem [#allocation6], %s252
        %v254 = vld [vmem:[%s220] sm:$0xff]
        %v255 = vld [vmem:[%s228] sm:$0x1]
        %v256 = vlaneseq
        %v257 = vshrl.u32 %v256, 7
        %v258 = vsub.s32 0, %v257
        %v259 = vrot.slane %v255, %v258
        %v260 = vmul.f32 %v254, %v259
        %s261 = scalar_lea.vmem %s228, 16 [#allocation5]
        %v262 = vld [vmem:[%s261] sm:$0x1]
        %v263 = vlaneseq
        %v264 = vshrl.u32 %v263, 7
        %v265 = vsub.s32 0, %v264
        %v266 = vrot.slane %v262, %v265
        %v267 = vmul.f32 %v254, %v266
        %s268 = scalar_lea.vmem %s220, 8 [#allocation2]
        %v269 = vld [vmem:[%s268] sm:$0xff]
        %v270 = vld [vmem:[%s228 + $0x1] sm:$0x1]
        %v271 = vlaneseq
        %v272 = vshrl.u32 %v271, 7
        %v273 = vsub.s32 0, %v272
        %v274 = vrot.slane %v270, %v273
        %v275 = vmul.f32 %v269, %v274
        %v276 = vadd.f32 %v260, %v275
        %v277 = vld [vmem:[%s261 + $0x1] sm:$0x1]
        %v278 = vlaneseq
        %v279 = vshrl.u32 %v278, 7
        %v280 = vsub.s32 0, %v279
        %v281 = vrot.slane %v277, %v280
        %v282 = vmul.f32 %v269, %v281
        %v283 = vadd.f32 %v267, %v282
        %s284 = scalar_lea.vmem %s220, 16 [#allocation2]
        %v285 = vld [vmem:[%s284] sm:$0xff]
        %v286 = vld [vmem:[%s228 + $0x2] sm:$0x1]
        %v287 = vlaneseq
        %v288 = vshrl.u32 %v287, 7
        %v289 = vsub.s32 0, %v288
        %v290 = vrot.slane %v286, %v289
        %v291 = vmul.f32 %v285, %v290
        %v292 = vadd.f32 %v276, %v291
        %v293 = vld [vmem:[%s261 + $0x2] sm:$0x1]
        %v294 = vlaneseq
        %v295 = vshrl.u32 %v294, 7
        %v296 = vsub.s32 0, %v295
        %v297 = vrot.slane %v293, %v296
        %v298 = vmul.f32 %v285, %v297
        %v299 = vadd.f32 %v283, %v298
        %s300 = scalar_lea.vmem %s220, 24 [#allocation2]
        %v301 = vld [vmem:[%s300] sm:$0xff]
        %v302 = vld [vmem:[%s228 + $0x3] sm:$0x1]
        %v303 = vlaneseq
        %v304 = vshrl.u32 %v303, 7
        %v305 = vsub.s32 0, %v304
        %v306 = vrot.slane %v302, %v305
        %v307 = vmul.f32 %v301, %v306
        %v308 = vadd.f32 %v292, %v307
        %v309 = vld [vmem:[%s261 + $0x3] sm:$0x1]
        %v310 = vlaneseq
        %v311 = vshrl.u32 %v310, 7
        %v312 = vsub.s32 0, %v311
        %v313 = vrot.slane %v309, %v312
        %v314 = vmul.f32 %v301, %v313
        %v315 = vadd.f32 %v299, %v314
        %s316 = scalar_lea.vmem %s220, 32 [#allocation2]
        %v317 = vld [vmem:[%s316] sm:$0xff]
        %v318 = vld [vmem:[%s228 + $0x4] sm:$0x1]
        %v319 = vlaneseq
        %v320 = vshrl.u32 %v319, 7
        %v321 = vsub.s32 0, %v320
        %v322 = vrot.slane %v318, %v321
        %v323 = vmul.f32 %v317, %v322
        %v324 = vadd.f32 %v308, %v323
        %v325 = vld [vmem:[%s261 + $0x4] sm:$0x1]
        %v326 = vlaneseq
        %v327 = vshrl.u32 %v326, 7
        %v328 = vsub.s32 0, %v327
        %v329 = vrot.slane %v325, %v328
        %v330 = vmul.f32 %v317, %v329
        %v331 = vadd.f32 %v315, %v330
        %s332 = scalar_lea.vmem %s220, 40 [#allocation2]
        %v333 = vld [vmem:[%s332] sm:$0xff]
        %v334 = vld [vmem:[%s228 + $0x5] sm:$0x1]
        %v335 = vlaneseq
        %v336 = vshrl.u32 %v335, 7
        %v337 = vsub.s32 0, %v336
        %v338 = vrot.slane %v334, %v337
        %v339 = vmul.f32 %v333, %v338
        %v340 = vadd.f32 %v324, %v339
        %v341 = vld [vmem:[%s261 + $0x5] sm:$0x1]
        %v342 = vlaneseq
        %v343 = vshrl.u32 %v342, 7
        %v344 = vsub.s32 0, %v343
        %v345 = vrot.slane %v341, %v344
        %v346 = vmul.f32 %v333, %v345
        %v347 = vadd.f32 %v331, %v346
        %s348 = scalar_lea.vmem %s220, 48 [#allocation2]
        %v349 = vld [vmem:[%s348] sm:$0xff]
        %v350 = vld [vmem:[%s228 + $0x6] sm:$0x1]
        %v351 = vlaneseq
        %v352 = vshrl.u32 %v351, 7
        %v353 = vsub.s32 0, %v352
        %v354 = vrot.slane %v350, %v353
        %v355 = vmul.f32 %v349, %v354
        %v356 = vadd.f32 %v340, %v355
        %v357 = vld [vmem:[%s261 + $0x6] sm:$0x1]
        %v358 = vlaneseq
        %v359 = vshrl.u32 %v358, 7
        %v360 = vsub.s32 0, %v359
        %v361 = vrot.slane %v357, %v360
        %v362 = vmul.f32 %v349, %v361
        %v363 = vadd.f32 %v347, %v362
        %s364 = scalar_lea.vmem %s220, 56 [#allocation2]
        %v365 = vld [vmem:[%s364] sm:$0xff]
        %v366 = vld [vmem:[%s228 + $0x7] sm:$0x1]
        %v367 = vlaneseq
        %v368 = vshrl.u32 %v367, 7
        %v369 = vsub.s32 0, %v368
        %v370 = vrot.slane %v366, %v369
        %v371 = vmul.f32 %v365, %v370
        %v372 = vadd.f32 %v356, %v371
        %v373 = vld [vmem:[%s261 + $0x7] sm:$0x1]
        %v374 = vlaneseq
        %v375 = vshrl.u32 %v374, 7
        %v376 = vsub.s32 0, %v375
        %v377 = vrot.slane %v373, %v376
        %v378 = vmul.f32 %v365, %v377
        %v379 = vadd.f32 %v363, %v378
        %s380 = scalar_lea.vmem %s220, 64 [#allocation2]
        %v381 = vld [vmem:[%s380] sm:$0xff]
        %v382 = vld [vmem:[%s228 + $0x8] sm:$0x1]
        %v383 = vlaneseq
        %v384 = vshrl.u32 %v383, 7
        %v385 = vsub.s32 0, %v384
        %v386 = vrot.slane %v382, %v385
        %v387 = vmul.f32 %v381, %v386
        %v388 = vadd.f32 %v372, %v387
        %v389 = vld [vmem:[%s261 + $0x8] sm:$0x1]
        %v390 = vlaneseq
        %v391 = vshrl.u32 %v390, 7
        %v392 = vsub.s32 0, %v391
        %v393 = vrot.slane %v389, %v392
        %v394 = vmul.f32 %v381, %v393
        %v395 = vadd.f32 %v379, %v394
        %s396 = scalar_lea.vmem %s220, 72 [#allocation2]
        %v397 = vld [vmem:[%s396] sm:$0xff]
        %v398 = vld [vmem:[%s228 + $0x9] sm:$0x1]
        %v399 = vlaneseq
        %v400 = vshrl.u32 %v399, 7
        %v401 = vsub.s32 0, %v400
        %v402 = vrot.slane %v398, %v401
        %v403 = vmul.f32 %v397, %v402
        %v404 = vadd.f32 %v388, %v403
        %v405 = vld [vmem:[%s261 + $0x9] sm:$0x1]
        %v406 = vlaneseq
        %v407 = vshrl.u32 %v406, 7
        %v408 = vsub.s32 0, %v407
        %v409 = vrot.slane %v405, %v408
        %v410 = vmul.f32 %v397, %v409
        %v411 = vadd.f32 %v395, %v410
        %s412 = scalar_lea.vmem %s220, 80 [#allocation2]
        %v413 = vld [vmem:[%s412] sm:$0xff]
        %v414 = vld [vmem:[%s228 + $0xa] sm:$0x1]
        %v415 = vlaneseq
        %v416 = vshrl.u32 %v415, 7
        %v417 = vsub.s32 0, %v416
        %v418 = vrot.slane %v414, %v417
        %v419 = vmul.f32 %v413, %v418
        %v420 = vadd.f32 %v404, %v419
        %v421 = vld [vmem:[%s261 + $0xa] sm:$0x1]
        %v422 = vlaneseq
        %v423 = vshrl.u32 %v422, 7
        %v424 = vsub.s32 0, %v423
        %v425 = vrot.slane %v421, %v424
        %v426 = vmul.f32 %v413, %v425
        %v427 = vadd.f32 %v411, %v426
        %s428 = scalar_lea.vmem %s220, 88 [#allocation2]
        %v429 = vld [vmem:[%s428] sm:$0xff]
        %v430 = vld [vmem:[%s228 + $0xb] sm:$0x1]
        %v431 = vlaneseq
        %v432 = vshrl.u32 %v431, 7
        %v433 = vsub.s32 0, %v432
        %v434 = vrot.slane %v430, %v433
        %v435 = vmul.f32 %v429, %v434
        %v436 = vadd.f32 %v420, %v435
        %v437 = vld [vmem:[%s261 + $0xb] sm:$0x1]
        %v438 = vlaneseq
        %v439 = vshrl.u32 %v438, 7
        %v440 = vsub.s32 0, %v439
        %v441 = vrot.slane %v437, %v440
        %v442 = vmul.f32 %v429, %v441
        %v443 = vadd.f32 %v427, %v442
        %v444 = vld [vmem:[%s2] sm:$0xff]
        %446 = vset.pattern.permute.xlu0 0
        %447 = vperm.xlu0 %446, %v444
        %v448 = vpop.permute.xlu0 %447
        %v450 = vadd.f32 %v436, %v448
        %451 = vst [vmem:[%s253] sm:$0xff] %v450
        %v452 = vld [vmem:[%s2] sm:$0xff]
        %454 = vset.pattern.permute.xlu0 0
        %455 = vperm.xlu0 %454, %v452
        %v456 = vpop.permute.xlu0 %455
        %v458 = vadd.f32 %v443, %v456
        %s459 = scalar_lea.vmem %s253, 8 [#allocation6]
        %460 = vst [vmem:[%s459] sm:$0xff] %v458
        %s461 = sand.u32 %s101, 1
        %s462 = scalar_lea.sflag [#allocation4], %s461
        %s463 = sand.u32 %s101, 1
        %s464 = smul.addr %s463, 16
        %s465 = scalar_lea.vmem [#allocation6], %s464
        // Predicated region
        $region75: #{tpu_custom_call.1} parent=65 // pred_check
          %p466 = pneg %p111
        $region76: #{tpu_custom_call.1} parent=65 // pred_check_branch
          %468 = sbr.rel (%p466) target = $region78
        $region77: #{tpu_custom_call.1} parent=65 // pred_region
          %s470 = ssub.s32 256, 256
          %471 = vsyncadd %s462, %s470
          %s472 = smul.addr %s20, 128
          %s473 = scalar_lea.hbm %s3, %s472
          %s474 = sshll.u32 %s465, 4
          %s475 = int_to_ptr.vmem [resolvable:$true] %s474
          %480 = dma.vmem_to_hbm [thread:$0]  %s475, 256, %s473, %s462, 128, 256, 8
        $region78: #{tpu_custom_call.1} parent=65 // pred_fallthru
          _
      $region66: #{tpu_custom_call.1} parent=5 // pred_fallthru
        _
      %p481 = scmp.le.s32.totalorder 2, %s15
      // Predicated region
      $region79: #{tpu_custom_call.1} parent=5 // pred_check
        %p482 = pneg %p481
      $region80: #{tpu_custom_call.1} parent=5 // pred_check_branch
        %484 = sbr.rel (%p482) target = $region82
      $region81: #{tpu_custom_call.1} parent=5 // pred_region
        %s485 = ssub.s32 %s15, 2
        // Predicated region
        $region83: #{tpu_custom_call.1} parent=81 // pred_check
          %p486 = pneg %p117
        $region84: #{tpu_custom_call.1} parent=81 // pred_check_branch
          %488 = sbr.rel (%p486) target = $region86
        $region85: #{tpu_custom_call.1} parent=81 // pred_region
          %s489 = sand.u32 %s102, 1
          %s490 = scalar_lea.sflag [#allocation4], %s489
          %s491 = sand.u32 %s102, 1
          %s492 = smul.addr %s491, 16
          %s493 = scalar_lea.vmem [#allocation6], %s492
          %494 = dma.done %s490, 256
        $region86: #{tpu_custom_call.1} parent=81 // pred_fallthru
          _
      $region82: #{tpu_custom_call.1} parent=5 // pred_fallthru
        _
    $region6: #{tpu_custom_call.1} parent=1 // loop_footer
      %s19 = sadd.s32 1, %s15
    $region7: #{tpu_custom_call.1} parent=1 // loop_footer_branch
      %14 = sbr.rel target = $region3
    $region8: #{tpu_custom_call.1} parent=1 // loop_exit
      _
    %495 = vsyncpa [#allocation3], 1
    %s496 = scalar_lea.sflag [#allocation3], 1
    %497 = vsyncpa %s496, 1
    %498 = vsyncpa [#allocation4], 1
    %s499 = scalar_lea.sflag [#allocation4], 1
    %500 = vsyncpa %s499, 1

</llo_original>
